<compile_context>
chip_gen: v6e
topology: v6e:2x2x1
jax: 0.10.0
libtpu: 0.0.40
codegen_flags: <defaults>
</compile_context>

<pallas_src>
import functools

import jax
import jax.numpy as jnp
from jax.experimental import pallas as pl
from jax.experimental.pallas import tpu as pltpu

_CPARAMS = pltpu.CompilerParams(dimension_semantics=("arbitrary",))


def _full_spec(shape):
    # Whole array as one block (allowed: last two block dims equal full dims).
    return pl.BlockSpec(shape, lambda i: (0,) * len(shape))


# ----------------------------------------------------------------------------
# Pallas single-block matmul (all contractions here are tiny; everything fits
# in VMEM as one block -> no padding, no pad/slice HBM copies, 1 grid step).
# ----------------------------------------------------------------------------
def _mm_kernel(a_ref, b_ref, o_ref):
    o_ref[...] = jnp.dot(a_ref[...], b_ref[...],
                         preferred_element_type=jnp.float32)


def matmul_pallas(a, b):
    a = a.astype(jnp.float32)
    b = b.astype(jnp.float32)
    M, K = a.shape
    K2, N = b.shape
    assert K == K2, (a.shape, b.shape)
    return pl.pallas_call(
        _mm_kernel,
        out_shape=jax.ShapeDtypeStruct((M, N), jnp.float32),
        grid=(1,),
        in_specs=[_full_spec((M, K)), _full_spec((K, N))],
        out_specs=_full_spec((M, N)),
        compiler_params=_CPARAMS,
    )(a, b)


# ----------------------------------------------------------------------------
# initialize_cont: control = projection(x) - x = (x q_in) q_in^T - x  (fused).
# ----------------------------------------------------------------------------
def _make_init_cont(B, D, R):
    def kernel(x_ref, q_ref, qt_ref, o_ref):
        xq = jnp.dot(x_ref[...], q_ref[...], preferred_element_type=jnp.float32)
        o_ref[...] = jnp.dot(xq, qt_ref[...],
                             preferred_element_type=jnp.float32) - x_ref[...]

    return pl.pallas_call(
        kernel,
        out_shape=jax.ShapeDtypeStruct((B, D), jnp.float32),
        grid=(1,),
        in_specs=[_full_spec((B, D)), _full_spec((D, R)), _full_spec((R, D))],
        out_specs=_full_spec((B, D)),
        compiler_params=_CPARAMS,
    )


# ----------------------------------------------------------------------------
# Fused Maximize_Hamilton inner loop: `inner_ite` steps of
#   grad = (xc - (xc q) q^T)/B + (REG/B) * ctrl + g_ham
#   buf  = momentum*buf + grad ; ctrl -= lr*buf        (torch.optim.SGD)
# with everything VMEM-resident (x, ctrl, g_ham, q_in, q_in^T < 600 KB total).
# ----------------------------------------------------------------------------
def _make_inner_loop(B, D, R, inner_ite, lr, momentum, reg):
    inv_b = 1.0 / B

    def kernel(x_ref, c_ref, g_ref, q_ref, qt_ref, o_ref):
        x = x_ref[...]
        g_ham = g_ref[...]
        q = q_ref[...]
        qt = qt_ref[...]
        ctrl = c_ref[...]
        buf = jnp.zeros_like(ctrl)          # fresh momentum buffer per call
        for _ in range(inner_ite):          # small static trip count: unrolled
            xc = x + ctrl
            xq = jnp.dot(xc, q, preferred_element_type=jnp.float32)
            proj = jnp.dot(xq, qt, preferred_element_type=jnp.float32)
            grad = (xc - proj) * inv_b + (reg * inv_b) * ctrl + g_ham
            buf = momentum * buf + grad
            ctrl = ctrl - lr * buf
        o_ref[...] = ctrl

    return pl.pallas_call(
        kernel,
        out_shape=jax.ShapeDtypeStruct((B, D), jnp.float32),
        grid=(1,),
        in_specs=[_full_spec((B, D)), _full_spec((B, D)), _full_spec((B, D)),
                  _full_spec((D, R)), _full_spec((R, D))],
        out_specs=_full_spec((B, D)),
        compiler_params=_CPARAMS,
    )


# ----------------------------------------------------------------------------
# Final head: outputs = (hiddens @ P_hid) @ w_head + b_head  (fused).
# ----------------------------------------------------------------------------
def _make_head(B, HID, NCLS):
    def kernel(h_ref, p_ref, w_ref, b_ref, o_ref):
        hc = jnp.dot(h_ref[...], p_ref[...], preferred_element_type=jnp.float32)
        o_ref[...] = jnp.dot(hc, w_ref[...],
                             preferred_element_type=jnp.float32) + b_ref[...]

    return pl.pallas_call(
        kernel,
        out_shape=jax.ShapeDtypeStruct((B, NCLS), jnp.float32),
        grid=(1,),
        in_specs=[_full_spec((B, HID)), _full_spec((HID, HID)),
                  _full_spec((HID, NCLS)), _full_spec((1, NCLS))],
        out_specs=_full_spec((B, NCLS)),
        compiler_params=_CPARAMS,
    )


# ----------------------------------------------------------------------------
# 3x3 "same" conv as im2col GEMM (PyTorch Conv2d semantics, NCHW input).
# K = C_in*9 is kept at its true size (no padding to 128).
# ----------------------------------------------------------------------------
def _im2col(x_nchw):
    B, C, H, W = x_nchw.shape
    xp = jnp.pad(x_nchw, ((0, 0), (0, 0), (1, 1), (1, 1)))
    taps = [xp[:, :, ky:ky + H, kx:kx + W] for ky in range(3) for kx in range(3)]
    p = jnp.stack(taps, axis=2)                       # [B, C, 9, H, W]
    return p.transpose(0, 3, 4, 1, 2).reshape(B * H * W, C * 9)


def conv3x3_cols(x_nchw, w_col):
    # Returns conv output as columns [B*H*W, C_out] in (b, h, w) row order.
    return matmul_pallas(_im2col(x_nchw), w_col)


# ----------------------------------------------------------------------------
# Parameters (deterministic, synthetic).
# ----------------------------------------------------------------------------
def make_params(key, C, H, W, F, HID, NCLS, rank_in, rank_hid):
    D = C * H * W
    ks = jax.random.split(key, 6)
    q_in, _ = jnp.linalg.qr(jax.random.normal(ks[0], (D, rank_in), jnp.float32))
    q_h, _ = jnp.linalg.qr(jax.random.normal(ks[1], (HID, rank_hid), jnp.float32))
    return dict(
        q_in=q_in,                                   # low-rank factor: P_in = q q^T
        P_hid=matmul_pallas(q_h, q_h.T),             # hidden-space projector
        w_conv=0.1 * jax.random.normal(ks[2], (F, C, 3, 3), jnp.float32),
        w_feat=0.1 * jax.random.normal(ks[3], (F, HID), jnp.float32),
        w_head=0.1 * jax.random.normal(ks[4], (HID, NCLS), jnp.float32),
        b_head=0.01 * jax.random.normal(ks[5], (NCLS,), jnp.float32),
    )


# ----------------------------------------------------------------------------
# clc_lin_dyn.forward
# ----------------------------------------------------------------------------
def clc_lin_dyn_forward(x, params, *, outer_ite=2, inner_ite=3, reg=0.1,
                        epsilon=8.0 / 255.0, momentum=0.9):
    B, C, H, W = x.shape
    D = C * H * W
    q_in = params["q_in"]
    R = q_in.shape[1]
    P_hid = params["P_hid"]
    w_conv, w_feat = params["w_conv"], params["w_feat"]
    w_head, b_head = params["w_head"], params["b_head"]
    F = w_conv.shape[0]
    HID = P_hid.shape[0]
    NCLS = w_head.shape[1]
    lr_inner = epsilon / 2.0      # Maximize_Hamilton: SGD(lr=RADIUS/2, momentum=0.9)

    q_in_t = q_in.T
    # Constant im2col weight matrices, built once (not per conv call).
    w_col_f = w_conv.transpose(1, 2, 3, 0).reshape(C * 9, F)         # forward conv
    w_conv_t = jnp.flip(w_conv, axis=(2, 3)).transpose(1, 0, 2, 3)   # [C, F, 3, 3]
    w_col_b = w_conv_t.transpose(1, 2, 3, 0).reshape(F * 9, C)       # conv^T (adjoint)

    # Analytic adjoint chain.  hiddens_orth_compl = h P_hid (I - P_hid) == 0 for
    # an exact orthogonal projector, so loss_recon's gradient is dropped; the
    # REG regularizer gives  d(loss)/d(pooled) = (REG/B) pooled @ A_adj  with
    # A_adj = w_feat (I - P_hid) w_feat^T  (closed form of (P-I)(P-I)^T).
    I_hid = jnp.eye(HID, dtype=jnp.float32)
    A_adj = matmul_pallas(matmul_pallas(w_feat, I_hid - P_hid), w_feat.T)  # [F, F]

    init_cont = _make_init_cont(B, D, R)
    inner_loop = _make_inner_loop(B, D, R, inner_ite, lr_inner, momentum, reg)
    head = _make_head(B, HID, NCLS)

    # TODO(synk): the real target_model is a pretrained resnet/efficientnet;
    # this surrogate keeps the layer_one (conv1) structure the PMP adjoint
    # needs: conv1 -> relu -> global-avg-pool -> linear.
    x_flat = x.reshape(B, D)                    # NCHW flattening (torch .view order)

    # initialize_cont: control = projection(x) - x  (low-rank projector form).
    control_flat = init_cont(x_flat, q_in, q_in_t)

    for _ in range(outer_ite):
        x_cont = (x_flat + control_flat).reshape(B, C, H, W)
        c1_cols = conv3x3_cols(x_cont, w_col_f)                 # layer_one_out cols
        pooled = jnp.maximum(c1_cols, 0.0).reshape(B, H * W, F).mean(axis=1)

        # adjoint = -d(loss_recon/2 + REG/2 * loss_regu)/d(layer_one_out)
        g_pooled = (reg / B) * matmul_pallas(pooled, A_adj)     # [B, F]
        g_a = jnp.broadcast_to(g_pooled[:, None, :] / (H * W), (B, H * W, F))
        adjoint_cols = -jnp.where(c1_cols > 0.0, g_a.reshape(B * H * W, F), 0.0)
        adjoint = adjoint_cols.reshape(B, H, W, F).transpose(0, 3, 1, 2)

        # dH/d(control) = conv^T(adjoint)/B, constant over the inner SGD steps.
        gham_cols = conv3x3_cols(adjoint, w_col_b)              # [B*H*W, C]
        g_ham = gham_cols.reshape(B, H, W, C).transpose(0, 3, 1, 2).reshape(B, D) / B

        # Maximize_Hamilton (fresh momentum buffer each outer iteration),
        # fully fused + VMEM-resident.
        control_flat = inner_loop(x_flat, control_flat, g_ham, q_in, q_in_t)

    # Final pass with the optimized control.
    x_cont = (x_flat + control_flat).reshape(B, C, H, W)
    c1_cols = conv3x3_cols(x_cont, w_col_f)
    pooled = jnp.maximum(c1_cols, 0.0).reshape(B, H * W, F).mean(axis=1)
    hiddens = matmul_pallas(pooled, w_feat)                     # [B, HID]
    outputs = head(hiddens, P_hid, w_head, b_head.reshape(1, NCLS))
    return outputs


if __name__ == "__main__":
    B, C, H, W = 2, 4, 16, 16
    F, HID, NCLS = 8, 128, 10
    key = jax.random.PRNGKey(0)
    k_x, k_p = jax.random.split(key)
    params = make_params(k_p, C, H, W, F, HID, NCLS, rank_in=64, rank_hid=32)
    x = jax.random.normal(k_x, (B, C, H, W), jnp.float32)

    fwd = jax.jit(functools.partial(clc_lin_dyn_forward))
    out = jax.block_until_ready(fwd(x, params))

    assert out.shape == (B, NCLS), out.shape
    assert bool(jnp.all(jnp.isfinite(out)))
    print("KERNEL_OK")
</pallas_src>

<mosaic_0001>
module attributes {stable_mosaic.version = 11 : i64} {
  func.func @_mm_kernel(%arg0: i32, %arg1: memref<128x32xf32, #tpu.memory_space<vmem>>, %arg2: memref<32x128xf32, #tpu.memory_space<vmem>>, %arg3: memref<128x128xf32, #tpu.memory_space<vmem>>) attributes {dimension_semantics = [#tpu.dimension_semantics<arbitrary>], iteration_bounds = array<i64: 1>, scalar_prefetch = 0 : i64, scratch_operands = 0 : i64, tpu.core_type = #tpu.core_type<tc>, window_params = [{pipeline_mode = #tpu.pipeline_mode<synchronous>, transform_indices = @transform_0, window_bounds = array<i64: 128, 32>}, {pipeline_mode = #tpu.pipeline_mode<synchronous>, transform_indices = @transform_1, window_bounds = array<i64: 32, 128>}, {pipeline_mode = #tpu.pipeline_mode<synchronous>, transform_indices = @transform_2, window_bounds = array<i64: 128, 128>}]} {
    %c0 = arith.constant 0 : index
    %c0_0 = arith.constant 0 : index
    %0 = vector.load %arg1[%c0, %c0_0] : memref<128x32xf32, #tpu.memory_space<vmem>>, vector<128x32xf32>
    %c0_1 = arith.constant 0 : index
    %c0_2 = arith.constant 0 : index
    %1 = vector.load %arg2[%c0_1, %c0_2] : memref<32x128xf32, #tpu.memory_space<vmem>>, vector<32x128xf32>
    %cst = arith.constant dense<0.000000e+00> : vector<128x128xf32>
    %2 = tpu.matmul %0, %1, %cst {dimension_numbers = #tpu.dot_dimension_numbers<[1], [0], [0], [1], [0, 0, 1, 1], [], []>} : vector<128x32xf32>, vector<32x128xf32>, vector<128x128xf32> -> vector<128x128xf32>
    %c0_3 = arith.constant 0 : index
    %c0_4 = arith.constant 0 : index
    %3 = vector.load %arg3[%c0_3, %c0_4] : memref<128x128xf32, #tpu.memory_space<vmem>>, vector<128x128xf32>
    tpu.vector_store %arg3[%c0_3, %c0_4], %2 {strides = array<i32>} : memref<128x128xf32, #tpu.memory_space<vmem>>, vector<128x128xf32>,
    return
  }
  func.func @transform_0(%arg0: i32) -> (i32, i32) {
    %c0_i32 = arith.constant 0 : i32
    %c0_i32_0 = arith.constant 0 : i32
    %c0_i32_1 = arith.constant 0 : i32
    return %c0_i32, %c0_i32_0 : i32, i32
  }
  func.func @transform_1(%arg0: i32) -> (i32, i32) {
    %c0_i32 = arith.constant 0 : i32
    %c0_i32_0 = arith.constant 0 : i32
    %c0_i32_1 = arith.constant 0 : i32
    return %c0_i32, %c0_i32_0 : i32, i32
  }
  func.func @transform_2(%arg0: i32) -> (i32, i32) {
    %c0_i32 = arith.constant 0 : i32
    %c0_i32_0 = arith.constant 0 : i32
    %c0_i32_1 = arith.constant 0 : i32
    return %c0_i32, %c0_i32_0 : i32, i32
  }
}

</mosaic_0001>

<llo_original>
// kernel: tpu_custom_call.1
$region0: #{tpu_custom_call.1}
  #allocation0 [shape = 'u32[]', space=smem, size = 0x4, offset = 0x4, fixed_abs, tag = 'smem constant byte address 0x4 - core index']
  #allocation1 [shape = 'u32[144,128]{1,0:T(1,128)}', space=vmem, size = 0x12000, scoped, tag = 'internal scratch']
  %s0 = inlined_call_operand.vmem [shape: f32[128,32], index: 0, kind: input, shape index: {}]
  %s1 = inlined_call_operand.vmem [shape: f32[32,128], index: 1, kind: input, shape index: {}]
  %s2 = inlined_call_operand.hbm [shape: f32[128,128], index: 2, kind: output, shape index: {}]
  %s3 = sld [smem:[#allocation0]]
  $region18: #{tpu_custom_call.1} parent=0
    _
  %s5 = ssub.s32 1, %s3
  %s6 = scalar_select 0, %s5, %s3
  $region1: #{tpu_custom_call.1} parent=0
    #allocation2 [shape = 'u8[65536]{0}', space=vmem, size = 0x10000, scoped, tag = 'output window, operand 0, single buffered']
    #allocation3 [shape = 's32[1]{0}', space=sflag, size = 0x4, scoped, tag = 'scoped memory for tpu_custom_call.1']
    %7 = vsyncpa [#allocation3], 0
    // Predicated region
    $region2: #{tpu_custom_call.1} parent=1 // pred_check
      _
    $region3: #{tpu_custom_call.1} parent=1 // pred_check_branch
      %9 = sbr.rel (0) target = $region5
    $region4: #{tpu_custom_call.1} parent=1 // pred_region
      _
    $region5: #{tpu_custom_call.1} parent=1 // pred_fallthru
      _
    // Predicated region
    $region6: #{tpu_custom_call.1} parent=1 // pred_check
      _
    $region7: #{tpu_custom_call.1} parent=1 // pred_check_branch
      %11 = sbr.rel (0) target = $region9
    $region8: #{tpu_custom_call.1} parent=1 // pred_region
      _
    $region9: #{tpu_custom_call.1} parent=1 // pred_fallthru
      _
    %v12 = vld [vmem:[%s0] sm:$0xff]
    %v13 = vld [vmem:[%s0 + $0x8] sm:$0xff]
    %v14 = vld [vmem:[%s0 + $0x10] sm:$0xff]
    %v15 = vld [vmem:[%s0 + $0x18] sm:$0xff]
    %v16 = vld [vmem:[%s0 + $0x20] sm:$0xff]
    %v17 = vld [vmem:[%s0 + $0x28] sm:$0xff]
    %v18 = vld [vmem:[%s0 + $0x30] sm:$0xff]
    %v19 = vld [vmem:[%s0 + $0x38] sm:$0xff]
    %v20 = vld [vmem:[%s0 + $0x40] sm:$0xff]
    %v21 = vld [vmem:[%s0 + $0x48] sm:$0xff]
    %v22 = vld [vmem:[%s0 + $0x50] sm:$0xff]
    %v23 = vld [vmem:[%s0 + $0x58] sm:$0xff]
    %v24 = vld [vmem:[%s0 + $0x60] sm:$0xff]
    %v25 = vld [vmem:[%s0 + $0x68] sm:$0xff]
    %v26 = vld [vmem:[%s0 + $0x70] sm:$0xff]
    %v27 = vld [vmem:[%s0 + $0x78] sm:$0xff]
    %v28 = vld [vmem:[%s1] sm:$0xff]
    %v29 = vld [vmem:[%s1 + $0x8] sm:$0xff]
    %v30 = vld [vmem:[%s1 + $0x10] sm:$0xff]
    %v31 = vld [vmem:[%s1 + $0x18] sm:$0xff]
    %vm32 = vcmask 261120
    %v34 = vsel %vm32, %v12, 0
    %v37 = vsel %vm32, %v13, 0
    %v40 = vsel %vm32, %v14, 0
    %v43 = vsel %vm32, %v15, 0
    %v46 = vsel %vm32, %v16, 0
    %v49 = vsel %vm32, %v17, 0
    %v52 = vsel %vm32, %v18, 0
    %v55 = vsel %vm32, %v19, 0
    %v58 = vsel %vm32, %v20, 0
    %v61 = vsel %vm32, %v21, 0
    %v64 = vsel %vm32, %v22, 0
    %v67 = vsel %vm32, %v23, 0
    %v70 = vsel %vm32, %v24, 0
    %v73 = vsel %vm32, %v25, 0
    %v76 = vsel %vm32, %v26, 0
    %v79 = vsel %vm32, %v27, 0
    %81 = vmatprep.subr.mxu0 0.0
    %82 = vmatpush1.msra.mxu0 0.0
    %83 = vmatprep.subr.mxu0 0.0
    %84 = vmatpush1.msra.mxu0 0.0
    %85 = vmatprep.subr.mxu0 0.0
    %86 = vmatpush1.msra.mxu0 0.0
    %87 = vmatprep.subr.mxu0 0.0
    %88 = vmatpush1.msra.mxu0 0.0
    %89 = vmatprep.subr.mxu0 0.0
    %90 = vmatpush1.msra.mxu0 0.0
    %91 = vmatprep.subr.mxu0 0.0
    %92 = vmatpush1.msra.mxu0 0.0
    %93 = vmatprep.subr.mxu0 0.0
    %94 = vmatpush1.msra.mxu0 0.0
    %95 = vmatprep.subr.mxu0 0.0
    %96 = vmatpush1.msra.mxu0 0.0
    %97 = vmatprep.subr.mxu0 0.0
    %98 = vmatpush1.msra.mxu0 0.0
    %99 = vmatprep.subr.mxu0 0.0
    %100 = vmatpush1.msra.mxu0 0.0
    %101 = vmatprep.subr.mxu0 0.0
    %102 = vmatpush1.msra.mxu0 0.0
    %103 = vmatprep.subr.mxu0 0.0
    %104 = vmatpush1.msra.mxu0 0.0
    %105 = vmatprep.subr.mxu0 0.0
    %106 = vmatpush1.msra.mxu0 %v31
    %107 = vmatprep.subr.mxu0 0.0
    %108 = vmatpush1.msra.mxu0 %v30
    %109 = vmatprep.subr.mxu0 0.0
    %110 = vmatpush1.msra.mxu0 %v29
    %111 = vmatprep.subr.mxu0 0.0
    %112 = vmatpush1.msra.mxu0 %v28
    %113 = vmatprep.subr.mxu0 0.0
    %114 = vmatpush2.msra.mxu0 0.0
    %115 = vmatprep.subr.mxu0 0.0
    %116 = vmatpush2.msra.mxu0 0.0
    %117 = vmatprep.subr.mxu0 0.0
    %118 = vmatpush2.msra.mxu0 0.0
    %119 = vmatprep.subr.mxu0 0.0
    %120 = vmatpush2.msra.mxu0 0.0
    %121 = vmatprep.subr.mxu0 0.0
    %122 = vmatpush2.msra.mxu0 0.0
    %123 = vmatprep.subr.mxu0 0.0
    %124 = vmatpush2.msra.mxu0 0.0
    %125 = vmatprep.subr.mxu0 0.0
    %126 = vmatpush2.msra.mxu0 0.0
    %127 = vmatprep.subr.mxu0 0.0
    %128 = vmatpush2.msra.mxu0 0.0
    %129 = vmatprep.subr.mxu0 0.0
    %130 = vmatpush2.msra.mxu0 0.0
    %131 = vmatprep.subr.mxu0 0.0
    %132 = vmatpush2.msra.mxu0 0.0
    %133 = vmatprep.subr.mxu0 0.0
    %134 = vmatpush2.msra.mxu0 0.0
    %135 = vmatprep.subr.mxu0 0.0
    %136 = vmatpush2.msra.mxu0 0.0
    %137 = vmatprep.subr.mxu0 0.0
    %138 = vmatpush2.msra.mxu0 0.0
    %139 = vmatprep.subr.mxu0 0.0
    %140 = vmatpush2.msra.mxu0 0.0
    %141 = vmatprep.subr.mxu0 0.0
    %142 = vmatpush2.msra.mxu0 0.0
    %143 = vmatprep.subr.mxu0 0.0
    %144 = vmatpush2.msra.mxu0 0.0
    %145 = vmatprep.mubr.f32.mxu0 0.0
    %146 = vmatmul.mubr.f32.gmra.mxu0 %v34
    %v147 = vpop.f32.mrf.mxu0
    %v148 = vadd.f32 0.0, %v147
    %v149 = vpop.f32.mrf.mxu0
    %150 = vmatprep.mubr.f32.mxu0 0.0
    %151 = vmatmul.mubr.f32.gmra.mxu0 %v37
    %v152 = vpop.f32.mrf.mxu0
    %v153 = vadd.f32 0.0, %v152
    %v154 = vpop.f32.mrf.mxu0
    %155 = vmatprep.mubr.f32.mxu0 0.0
    %156 = vmatmul.mubr.f32.gmra.mxu0 %v40
    %v157 = vpop.f32.mrf.mxu0
    %v158 = vadd.f32 0.0, %v157
    %v159 = vpop.f32.mrf.mxu0
    %160 = vmatprep.mubr.f32.mxu0 0.0
    %161 = vmatmul.mubr.f32.gmra.mxu0 %v43
    %v162 = vpop.f32.mrf.mxu0
    %v163 = vadd.f32 0.0, %v162
    %v164 = vpop.f32.mrf.mxu0
    %165 = vmatprep.mubr.f32.mxu0 0.0
    %166 = vmatmul.mubr.f32.gmra.mxu0 %v46
    %v167 = vpop.f32.mrf.mxu0
    %v168 = vadd.f32 0.0, %v167
    %v169 = vpop.f32.mrf.mxu0
    %170 = vmatprep.mubr.f32.mxu0 0.0
    %171 = vmatmul.mubr.f32.gmra.mxu0 %v49
    %v172 = vpop.f32.mrf.mxu0
    %v173 = vadd.f32 0.0, %v172
    %v174 = vpop.f32.mrf.mxu0
    %175 = vmatprep.mubr.f32.mxu0 0.0
    %176 = vmatmul.mubr.f32.gmra.mxu0 %v52
    %v177 = vpop.f32.mrf.mxu0
    %v178 = vadd.f32 0.0, %v177
    %v179 = vpop.f32.mrf.mxu0
    %180 = vmatprep.mubr.f32.mxu0 0.0
    %181 = vmatmul.mubr.f32.gmra.mxu0 %v55
    %v182 = vpop.f32.mrf.mxu0
    %v183 = vadd.f32 0.0, %v182
    %v184 = vpop.f32.mrf.mxu0
    %185 = vmatprep.mubr.f32.mxu0 0.0
    %186 = vmatmul.mubr.f32.gmra.mxu0 %v58
    %v187 = vpop.f32.mrf.mxu0
    %v188 = vadd.f32 0.0, %v187
    %v189 = vpop.f32.mrf.mxu0
    %190 = vmatprep.mubr.f32.mxu0 0.0
    %191 = vmatmul.mubr.f32.gmra.mxu0 %v61
    %v192 = vpop.f32.mrf.mxu0
    %v193 = vadd.f32 0.0, %v192
    %v194 = vpop.f32.mrf.mxu0
    %195 = vmatprep.mubr.f32.mxu0 0.0
    %196 = vmatmul.mubr.f32.gmra.mxu0 %v64
    %v197 = vpop.f32.mrf.mxu0
    %v198 = vadd.f32 0.0, %v197
    %v199 = vpop.f32.mrf.mxu0
    %200 = vmatprep.mubr.f32.mxu0 0.0
    %201 = vmatmul.mubr.f32.gmra.mxu0 %v67
    %v202 = vpop.f32.mrf.mxu0
    %v203 = vadd.f32 0.0, %v202
    %v204 = vpop.f32.mrf.mxu0
    %205 = vmatprep.mubr.f32.mxu0 0.0
    %206 = vmatmul.mubr.f32.gmra.mxu0 %v70
    %v207 = vpop.f32.mrf.mxu0
    %v208 = vadd.f32 0.0, %v207
    %v209 = vpop.f32.mrf.mxu0
    %210 = vmatprep.mubr.f32.mxu0 0.0
    %211 = vmatmul.mubr.f32.gmra.mxu0 %v73
    %v212 = vpop.f32.mrf.mxu0
    %v213 = vadd.f32 0.0, %v212
    %v214 = vpop.f32.mrf.mxu0
    %215 = vmatprep.mubr.f32.mxu0 0.0
    %216 = vmatmul.mubr.f32.gmra.mxu0 %v76
    %v217 = vpop.f32.mrf.mxu0
    %v218 = vadd.f32 0.0, %v217
    %v219 = vpop.f32.mrf.mxu0
    %220 = vmatprep.mubr.f32.mxu0 0.0
    %221 = vmatmul.mubr.f32.gmra.mxu0 %v79
    %v222 = vpop.f32.mrf.mxu0
    %v223 = vadd.f32 0.0, %v222
    %v224 = vpop.f32.mrf.mxu0
    %225 = vdwg.mxu0
    %226 = vst [vmem:[#allocation2] sm:$0xff] %v148
    %227 = vst [vmem:[#allocation2 + $0x8] sm:$0xff] %v153
    %228 = vst [vmem:[#allocation2 + $0x10] sm:$0xff] %v158
    %229 = vst [vmem:[#allocation2 + $0x18] sm:$0xff] %v163
    %230 = vst [vmem:[#allocation2 + $0x20] sm:$0xff] %v168
    %231 = vst [vmem:[#allocation2 + $0x28] sm:$0xff] %v173
    %232 = vst [vmem:[#allocation2 + $0x30] sm:$0xff] %v178
    %233 = vst [vmem:[#allocation2 + $0x38] sm:$0xff] %v183
    %234 = vst [vmem:[#allocation2 + $0x40] sm:$0xff] %v188
    %235 = vst [vmem:[#allocation2 + $0x48] sm:$0xff] %v193
    %236 = vst [vmem:[#allocation2 + $0x50] sm:$0xff] %v198
    %237 = vst [vmem:[#allocation2 + $0x58] sm:$0xff] %v203
    %238 = vst [vmem:[#allocation2 + $0x60] sm:$0xff] %v208
    %239 = vst [vmem:[#allocation2 + $0x68] sm:$0xff] %v213
    %240 = vst [vmem:[#allocation2 + $0x70] sm:$0xff] %v218
    %241 = vst [vmem:[#allocation2 + $0x78] sm:$0xff] %v223
    // Predicated region
    $region10: #{tpu_custom_call.1} parent=1 // pred_check
      _
    $region11: #{tpu_custom_call.1} parent=1 // pred_check_branch
      %243 = sbr.rel (0) target = $region13
    $region12: #{tpu_custom_call.1} parent=1 // pred_region
      %s245 = ssub.s32 2048, 2048
      %246 = vsyncadd [#allocation3], %s245
      %s247 = sshll.u32 [#allocation2], 4
      %s248 = int_to_ptr.vmem [resolvable:$true] %s247
      %253 = dma.vmem_to_hbm [thread:$0]  %s248, 2048, %s2, [#allocation3], 128, 128, 8
    $region13: #{tpu_custom_call.1} parent=1 // pred_fallthru
      _
    // Predicated region
    $region14: #{tpu_custom_call.1} parent=1 // pred_check
      _
    $region15: #{tpu_custom_call.1} parent=1 // pred_check_branch
      %255 = sbr.rel (0) target = $region17
    $region16: #{tpu_custom_call.1} parent=1 // pred_region
      %256 = dma.done [#allocation3], 2048
    $region17: #{tpu_custom_call.1} parent=1 // pred_fallthru
      _
    %257 = vsyncpa [#allocation3], 1

</llo_original>
